<compile_context>
chip_gen: v7x
topology: tpu7x:2x2x1
jax: 0.10.0
libtpu: 0.0.40
codegen_flags: <defaults>
</compile_context>

<pallas_src>
import math

import jax
import jax.numpy as jnp
from jax.experimental import pallas as pl
from jax.experimental.pallas import tpu as pltpu


_HASH_C1 = 0x7FEB352D      # lowbias32 constants
_HASH_C2 = 0x846CA68B
_GOLDEN = 0x9E3779B9       # odd golden-ratio constant for key mixing

_TWO_PI = 2.0 * math.pi
_INV_2_16 = 1.0 / float(1 << 16)


def _hash_u32(x):
    """lowbias32 on uint32 (logical shifts are single VPU / scalar ops)."""
    x = x ^ (x >> 16)
    x = x * jnp.uint32(_HASH_C1)
    x = x ^ (x >> 15)
    x = x * jnp.uint32(_HASH_C2)
    x = x ^ (x >> 16)
    return x


def _gaussian_noise_kernel(seed_ref, scale_ref, x_ref, o_ref):
    """o = x + scale * N(0, 1), with scale = eps * sigma (folded in the wrapper).

    One counter-based uint32 hash per output PAIR; the hash is split into two
    16-bit uniforms and pushed through Box-Muller using BOTH branches:
    cos -> lanes [0, L/2), sin -> lanes [L/2, L).
    Note: counter is 32-bit; noise would repeat only past 2^32 element pairs,
    far beyond DDPG tensor sizes.
    """
    tr, lanes = x_ref.shape
    half = lanes // 2

    # Per-tile key mixed on the (cheap) scalar path so the vector counter is
    # identical for every tile / grid step (loop-invariant vector work).
    pid = pl.program_id(0)
    key = _hash_u32(seed_ref[0].astype(jnp.uint32)
                    ^ (pid.astype(jnp.uint32) * jnp.uint32(_GOLDEN)))

    row = jax.lax.broadcasted_iota(jnp.int32, (tr, half), 0)
    col = jax.lax.broadcasted_iota(jnp.int32, (tr, half), 1)
    idx = (row * half + col).astype(jnp.uint32)

    h = _hash_u32(idx ^ key)

    # 16-bit uniforms are plenty of resolution for exploration noise.
    # u1 in (0, 1] (safe for log), u2 in [0, 1).
    inv16 = jnp.float32(_INV_2_16)
    u1 = ((h >> 16).astype(jnp.int32).astype(jnp.float32) + 1.0) * inv16
    u2 = (h & jnp.uint32(0xFFFF)).astype(jnp.int32).astype(jnp.float32) * inv16

    # Box-Muller; fold eps*sigma into the radius so it is applied once per pair.
    scale = scale_ref[0]
    r = jnp.sqrt(jnp.float32(-2.0) * jnp.log(u1)) * scale
    theta = jnp.float32(_TWO_PI) * u2

    o_ref[:, :half] = (x_ref[:, :half].astype(jnp.float32)
                       + r * jnp.cos(theta)).astype(o_ref.dtype)
    o_ref[:, half:] = (x_ref[:, half:].astype(jnp.float32)
                       + r * jnp.sin(theta)).astype(o_ref.dtype)


def _pick_lanes(n):
    """Lane-dense last dim, multiple of 256 so each Box-Muller half-store stays
    128-lane aligned.  Prefer a width that needs no padding and gives >= 8 rows
    (full sublane utilization)."""
    for lanes in (4096, 2048, 1024, 512, 256):
        if n % lanes == 0 and n >= 8 * lanes:
            return lanes
    for lanes in (4096, 2048, 1024, 512, 256):
        if n % lanes == 0:
            return lanes
    return 256


def _pick_tile_rows(rows, lanes, itemsize):
    """Row tile of ~2 MiB per buffer.  Double-buffered in+out is ~4x that,
    comfortably under v5e's 16 MiB and v7x's 32 MiB scoped-VMEM defaults while
    amortizing the ~0.35 us per-grid-step pipeline overhead.  No divisibility
    requirement: the pl.cdiv grid handles a partial last block.  Arrays that
    would otherwise be a single tile are split so v7x's 2 TCs both get work."""
    max_bytes = 2 * 1024 * 1024
    max_rows = max(8, ((max_bytes // (lanes * itemsize)) // 8) * 8)
    if rows <= 8:
        return rows                              # single block == full dim
    if rows <= max_rows:
        half_rows = ((rows + 1) // 2 + 7) // 8 * 8
        return min(rows, half_rows)              # >= 2 tiles, multiple of 8
    return max_rows


@jax.jit
def _noise_call(seed, scale, x2d):
    rows, lanes = x2d.shape
    tile_rows = _pick_tile_rows(rows, lanes, x2d.dtype.itemsize)
    num_tiles = pl.cdiv(rows, tile_rows)
    return pl.pallas_call(
        _gaussian_noise_kernel,
        out_shape=jax.ShapeDtypeStruct((rows, lanes), x2d.dtype),
        grid=(num_tiles,),
        in_specs=[
            pl.BlockSpec(memory_space=pltpu.SMEM),               # seed  (i32[1])
            pl.BlockSpec(memory_space=pltpu.SMEM),               # scale (f32[1]) = eps*sigma
            pl.BlockSpec((tile_rows, lanes), lambda i: (i, 0)),  # x tile (VMEM)
        ],
        out_specs=pl.BlockSpec((tile_rows, lanes), lambda i: (i, 0)),
        compiler_params=pltpu.CompilerParams(
            dimension_semantics=("parallel",),   # shard tiles across v7x's 2 TCs
        ),
    )(seed, scale, x2d)


class GaussianNoise:
    """JAX/Pallas port of the PyTorch GaussianNoise module (stateful eps decay)."""

    def __init__(self, sigma, eps_init, eps_decay, eps_final, epochs, average_length):
        self.sigma = float(sigma)
        self.eps = float(eps_init)
        self.decay = (eps_final / eps_init) ** (1.0 / (eps_decay * epochs * average_length))
        self.i = 0

    def __call__(self, x, seed=0):
        if self.sigma == 0:
            return x

        # Stateful epsilon decay (matches `self.eps *= self.decay`).
        self.eps *= self.decay
        self.i += 1

        # Per-call seed variation: mix the call counter so repeated calls with
        # the same user seed draw different exploration noise.
        seed_val = (int(seed) * 1000003 + self.i * 0x9E3779B1) & 0x7FFFFFFF

        orig_shape = x.shape
        orig_dtype = x.dtype
        flat = jnp.ravel(x)
        if not jnp.issubdtype(flat.dtype, jnp.floating):
            flat = flat.astype(jnp.float32)
        n = flat.shape[0]

        lanes = _pick_lanes(n)
        padded = ((n + lanes - 1) // lanes) * lanes
        if padded != n:
            # TODO(synk): ragged tail could be masked fully in-kernel via a
            # manual (pl.ANY) 1-D DMA path instead of this pad/slice pass.
            flat = jnp.pad(flat, (0, padded - n))
        x2d = flat.reshape(padded // lanes, lanes)

        seed_arr = jnp.asarray([seed_val], dtype=jnp.int32)
        scale_arr = jnp.asarray([self.eps * self.sigma], dtype=jnp.float32)

        out = _noise_call(seed_arr, scale_arr, x2d).reshape(-1)
        if padded != n:
            out = out[:n]
        out = out.reshape(orig_shape)
        if out.dtype != orig_dtype:
            out = out.astype(orig_dtype)
        return out


if __name__ == "__main__":
    key = jax.random.PRNGKey(0)
    # Small NCHW-like activation tensor, consistent with DDPG noise injection.
    x = jax.random.normal(key, (2, 4, 16, 16), dtype=jnp.float32)

    noise_layer = GaussianNoise(
        sigma=0.2, eps_init=1.0, eps_decay=0.5, eps_final=0.01,
        epochs=10, average_length=50,
    )

    y = noise_layer(x, seed=1234)
    y = jax.block_until_ready(y)

    assert y.shape == x.shape and y.dtype == x.dtype
    diff = (y - x).ravel()
    # Noise must actually perturb the input (sigma != 0 path).
    assert bool(jnp.any(jnp.abs(diff) > 0.0))
    # Added noise: ~zero mean, std ~ eps * sigma (~0.2); loose bounds.
    assert abs(float(jnp.mean(diff))) < 0.1
    std = float(jnp.std(diff))
    assert 0.05 < std < 0.5, std
    print("KERNEL_OK")
</pallas_src>

<mosaic_0001>
module attributes {stable_mosaic.version = 11 : i64} {
  func.func @_gaussian_noise_kernel(%arg0: i32, %arg1: memref<1xi32, #tpu.memory_space<smem>>, %arg2: memref<1xf32, #tpu.memory_space<smem>>, %arg3: memref<8x256xf32, #tpu.memory_space<vmem>>, %arg4: memref<8x256xf32, #tpu.memory_space<vmem>>) attributes {dimension_semantics = [#tpu.dimension_semantics<parallel>], iteration_bounds = array<i64: 1>, scalar_prefetch = 0 : i64, scratch_operands = 0 : i64, tpu.core_type = #tpu.core_type<tc>, window_params = [{transform_indices = @transform_0, window_bounds = array<i64: 1>}, {transform_indices = @transform_1, window_bounds = array<i64: 1>}, {transform_indices = @transform_2, window_bounds = array<i64: 8, 256>}, {transform_indices = @transform_3, window_bounds = array<i64: 8, 256>}]} {
    %c0 = arith.constant 0 : index
    %0 = memref.load %arg1[%c0] : memref<1xi32, #tpu.memory_space<smem>>
    %c-1640531527_i32 = arith.constant -1640531527 : i32
    %1 = arith.muli %arg0, %c-1640531527_i32 : i32
    %2 = arith.xori %0, %1 : i32
    %c16_i32 = arith.constant 16 : i32
    %3 = arith.shrui %2, %c16_i32 : i32
    %4 = arith.xori %2, %3 : i32
    %c2146121005_i32 = arith.constant 2146121005 : i32
    %5 = arith.muli %4, %c2146121005_i32 : i32
    %c15_i32 = arith.constant 15 : i32
    %6 = arith.shrui %5, %c15_i32 : i32
    %7 = arith.xori %5, %6 : i32
    %c-2073254261_i32 = arith.constant -2073254261 : i32
    %8 = arith.muli %7, %c-2073254261_i32 : i32
    %c16_i32_0 = arith.constant 16 : i32
    %9 = arith.shrui %8, %c16_i32_0 : i32
    %10 = arith.xori %8, %9 : i32
    %11 = tpu.iota {dimensions = array<i32: 0>} : vector<8x128xi32>
    %12 = tpu.iota {dimensions = array<i32: 1>} : vector<8x128xi32>
    %c128_i32 = arith.constant 128 : i32
    %13 = vector.broadcast %c128_i32 : i32 to vector<8x128xi32>
    %14 = arith.muli %11, %13 : vector<8x128xi32>
    %15 = arith.addi %14, %12 : vector<8x128xi32>
    %16 = vector.broadcast %10 : i32 to vector<8x128xi32>
    %17 = arith.xori %15, %16 : vector<8x128xi32>
    %c16_i32_1 = arith.constant 16 : i32
    %18 = vector.broadcast %c16_i32_1 : i32 to vector<8x128xi32>
    %19 = arith.shrui %17, %18 : vector<8x128xi32>
    %20 = arith.xori %17, %19 : vector<8x128xi32>
    %c2146121005_i32_2 = arith.constant 2146121005 : i32
    %21 = vector.broadcast %c2146121005_i32_2 : i32 to vector<8x128xi32>
    %22 = arith.muli %20, %21 : vector<8x128xi32>
    %c15_i32_3 = arith.constant 15 : i32
    %23 = vector.broadcast %c15_i32_3 : i32 to vector<8x128xi32>
    %24 = arith.shrui %22, %23 : vector<8x128xi32>
    %25 = arith.xori %22, %24 : vector<8x128xi32>
    %c-2073254261_i32_4 = arith.constant -2073254261 : i32
    %26 = vector.broadcast %c-2073254261_i32_4 : i32 to vector<8x128xi32>
    %27 = arith.muli %25, %26 : vector<8x128xi32>
    %c16_i32_5 = arith.constant 16 : i32
    %28 = vector.broadcast %c16_i32_5 : i32 to vector<8x128xi32>
    %29 = arith.shrui %27, %28 : vector<8x128xi32>
    %30 = arith.xori %27, %29 : vector<8x128xi32>
    %c16_i32_6 = arith.constant 16 : i32
    %31 = vector.broadcast %c16_i32_6 : i32 to vector<8x128xi32>
    %32 = arith.shrui %30, %31 : vector<8x128xi32>
    %33 = arith.sitofp %32 : vector<8x128xi32> to vector<8x128xf32>
    %cst = arith.constant 1.000000e+00 : f32
    %34 = vector.broadcast %cst : f32 to vector<8x128xf32>
    %35 = arith.addf %33, %34 : vector<8x128xf32>
    %cst_7 = arith.constant 1.52587891E-5 : f32
    %36 = vector.broadcast %cst_7 : f32 to vector<8x128xf32>
    %37 = arith.mulf %35, %36 : vector<8x128xf32>
    %c65535_i32 = arith.constant 65535 : i32
    %38 = vector.broadcast %c65535_i32 : i32 to vector<8x128xi32>
    %39 = arith.andi %30, %38 : vector<8x128xi32>
    %40 = arith.sitofp %39 : vector<8x128xi32> to vector<8x128xf32>
    %cst_8 = arith.constant 1.52587891E-5 : f32
    %41 = vector.broadcast %cst_8 : f32 to vector<8x128xf32>
    %42 = arith.mulf %40, %41 : vector<8x128xf32>
    %c0_9 = arith.constant 0 : index
    %43 = memref.load %arg2[%c0_9] : memref<1xf32, #tpu.memory_space<smem>>
    %44 = math.log %37 : vector<8x128xf32>
    %cst_10 = arith.constant -2.000000e+00 : f32
    %45 = vector.broadcast %cst_10 : f32 to vector<8x128xf32>
    %46 = arith.mulf %45, %44 : vector<8x128xf32>
    %47 = math.sqrt %46 : vector<8x128xf32>
    %48 = vector.broadcast %43 : f32 to vector<8x128xf32>
    %49 = arith.mulf %47, %48 : vector<8x128xf32>
    %cst_11 = arith.constant 6.28318548 : f32
    %50 = vector.broadcast %cst_11 : f32 to vector<8x128xf32>
    %51 = arith.mulf %50, %42 : vector<8x128xf32>
    %c0_12 = arith.constant 0 : index
    %c0_13 = arith.constant 0 : index
    %52 = vector.load %arg3[%c0_12, %c0_13] : memref<8x256xf32, #tpu.memory_space<vmem>>, vector<8x128xf32>
    %53 = math.cos %51 : vector<8x128xf32>
    %54 = arith.mulf %49, %53 : vector<8x128xf32>
    %55 = arith.addf %52, %54 : vector<8x128xf32>
    %c0_14 = arith.constant 0 : index
    %c0_15 = arith.constant 0 : index
    %56 = vector.load %arg4[%c0_14, %c0_15] : memref<8x256xf32, #tpu.memory_space<vmem>>, vector<8x128xf32>
    tpu.vector_store %arg4[%c0_14, %c0_15], %55 {strides = array<i32>} : memref<8x256xf32, #tpu.memory_space<vmem>>, vector<8x128xf32>,
    %c0_16 = arith.constant 0 : index
    %c128 = arith.constant 128 : index
    %57 = vector.load %arg3[%c0_16, %c128] : memref<8x256xf32, #tpu.memory_space<vmem>>, vector<8x128xf32>
    %58 = math.sin %51 : vector<8x128xf32>
    %59 = arith.mulf %49, %58 : vector<8x128xf32>
    %60 = arith.addf %57, %59 : vector<8x128xf32>
    %c0_17 = arith.constant 0 : index
    %c128_18 = arith.constant 128 : index
    %61 = vector.load %arg4[%c0_17, %c128_18] : memref<8x256xf32, #tpu.memory_space<vmem>>, vector<8x128xf32>
    tpu.vector_store %arg4[%c0_17, %c128_18], %60 {strides = array<i32>} : memref<8x256xf32, #tpu.memory_space<vmem>>, vector<8x128xf32>,
    return
  }
  func.func @transform_0(%arg0: i32) -> i32 {
    %c0_i32 = arith.constant 0 : i32
    %c0_i32_0 = arith.constant 0 : i32
    return %c0_i32 : i32
  }
  func.func @transform_1(%arg0: i32) -> i32 {
    %c0_i32 = arith.constant 0 : i32
    %c0_i32_0 = arith.constant 0 : i32
    return %c0_i32 : i32
  }
  func.func @transform_2(%arg0: i32) -> (i32, i32) {
    %c0_i32 = arith.constant 0 : i32
    %c0_i32_0 = arith.constant 0 : i32
    return %arg0, %c0_i32 : i32, i32
  }
  func.func @transform_3(%arg0: i32) -> (i32, i32) {
    %c0_i32 = arith.constant 0 : i32
    %c0_i32_0 = arith.constant 0 : i32
    return %arg0, %c0_i32 : i32, i32
  }
}

</mosaic_0001>

<llo_original>
// kernel: _noise_call.1
$region0: #{_noise_call.1}
  #allocation0 [shape = 'u32[]', space=smem, size = 0x4, offset = 0x4, fixed_abs, tag = 'smem constant byte address 0x4 - core index']
  #allocation1 [shape = 'u32[144,128]{1,0:T(1,128)}', space=vmem, size = 0x12000, scoped, tag = 'internal scratch']
  #allocation2 [shape = 's32[1]{0:T(128)S(6)}', space=smem, size = 0x200, scoped, tag = 'scoped memory for _noise_call.1']
  #allocation3 [shape = 'f32[1]{0:T(128)S(6)}', space=smem, size = 0x200, scoped, tag = 'scoped memory for _noise_call.1']
  %s0 = inlined_call_operand.<no memory space> [shape: s32[1], index: 0, kind: input, shape index: {}]
  %s1 = inlined_call_operand.<no memory space> [shape: f32[1], index: 1, kind: input, shape index: {}]
  %s2 = inlined_call_operand.hbm [shape: f32[8,256], index: 2, kind: input, shape index: {}]
  %s3 = inlined_call_operand.hbm [shape: f32[8,256], index: 3, kind: output, shape index: {}]
  %s4 = sld [smem:[#allocation0]]
  $region26: #{_noise_call.1} parent=0
    _
  %s6 = ssub.s32 1, %s4
  %s7 = scalar_select 0, %s6, %s4
  %8 = sst [smem:[#allocation2]] %s0
  %9 = sst [smem:[#allocation3]] %s1
  $region1: #{_noise_call.1} parent=0
    #allocation4 [shape = 'u8[8192]{0}', space=vmem, size = 0x2000, scoped, tag = 'input window, operand 2, single buffered']
    #allocation5 [shape = 's32[1]{0}', space=sflag, size = 0x4, scoped, tag = 'scoped memory for _noise_call.1']
    #allocation6 [shape = 's32[1]{0}', space=sflag, size = 0x4, scoped, tag = 'scoped memory for _noise_call.1']
    #allocation7 [shape = 'u8[8192]{0}', space=vmem, size = 0x2000, scoped, tag = 'output window, operand 0, single buffered']
    %10 = vsyncpa [#allocation5], 0
    %11 = vsyncpa [#allocation6], 0
    // Predicated region
    $region2: #{_noise_call.1} parent=1 // pred_check
      _
    $region3: #{_noise_call.1} parent=1 // pred_check_branch
      %13 = sbr.rel (0) target = $region5
    $region4: #{_noise_call.1} parent=1 // pred_region
      _
    $region5: #{_noise_call.1} parent=1 // pred_fallthru
      _
    // Predicated region
    $region6: #{_noise_call.1} parent=1 // pred_check
      _
    $region7: #{_noise_call.1} parent=1 // pred_check_branch
      %15 = sbr.rel (0) target = $region9
    $region8: #{_noise_call.1} parent=1 // pred_region
      _
    $region9: #{_noise_call.1} parent=1 // pred_fallthru
      _
    // Predicated region
    $region10: #{_noise_call.1} parent=1 // pred_check
      _
    $region11: #{_noise_call.1} parent=1 // pred_check_branch
      %17 = sbr.rel (0) target = $region13
    $region12: #{_noise_call.1} parent=1 // pred_region
      %s19 = ssub.s32 256, 256
      %20 = vsyncadd [#allocation5], %s19
      %s22 = sshll.u32 [#allocation4], 4
      %s23 = int_to_ptr.vmem [resolvable:$true] %s22
      %25 = dma.hbm_to_vmem [thread:$0]  %s2, 256, %s23, [#allocation5]
    $region13: #{_noise_call.1} parent=1 // pred_fallthru
      _
    // Predicated region
    $region14: #{_noise_call.1} parent=1 // pred_check
      _
    $region15: #{_noise_call.1} parent=1 // pred_check_branch
      %27 = sbr.rel (0) target = $region17
    $region16: #{_noise_call.1} parent=1 // pred_region
      %28 = dma.done [#allocation5], 256
    $region17: #{_noise_call.1} parent=1 // pred_fallthru
      _
    %s29 = sld [smem:[#allocation2]]
    %s30 = smul.u32 0, 2654435769
    %s31 = sxor.u32 %s29, %s30
    %s32 = sshrl.u32 %s31, 16
    %s33 = sxor.u32 %s31, %s32
    %s34 = smul.u32 %s33, 2146121005
    %s35 = sshrl.u32 %s34, 15
    %s36 = sxor.u32 %s34, %s35
    %s37 = smul.u32 %s36, 2221713035
    %s38 = sshrl.u32 %s37, 16
    %s39 = sxor.u32 %s37, %s38
    %v40 = vlaneseq
    %v41 = vshrl.u32 %v40, 7
    %v42 = vlaneseq
    %v43 = vand.u32 %v42, 127
    %v44 = vmul.u32 %v41, 128
    %v45 = vadd.s32 %v44, %v43
    %v46 = vstv %s39
    %v47 = vxor.u32 %v45, %v46
    %v48 = vshrl.u32 %v47, 16
    %v49 = vxor.u32 %v47, %v48
    %v50 = vmul.u32 %v49, 2146121005
    %v51 = vshrl.u32 %v50, 15
    %v52 = vxor.u32 %v50, %v51
    %v53 = vmul.u32 %v52, 2221713035
    %v54 = vshrl.u32 %v53, 16
    %v55 = vxor.u32 %v53, %v54
    %v56 = vshrl.u32 %v55, 16
    %v57 = vcvt.s32.f32 %v56
    %v58 = vadd.f32 %v57, 1.0
    %v59 = vmul.f32 %v58, 1.5258789e-05
    %v60 = vand.u32 %v55, 65535
    %v61 = vcvt.s32.f32 %v60
    %v62 = vmul.f32 %v61, 1.5258789e-05
    %s63 = sld [smem:[#allocation3]]
    %v64 = vlog2.pop %v59
    %v65 = vmul.f32 %v64, 0.6931472
    %v66 = vmul.f32 %v65, -2.0
    %v67 = vrsqrt.pop %v66
    %v68 = vmul.f32 %v66, %v67
    %vm69 = vcmp.eq.f32.partialorder %v66, inf
    %v70 = vsel %vm69, %v66, %v68
    %vm71 = vcmp.eq.f32.partialorder %v66, 0.0
    %v72 = vand.u32 %v66, 2147483648
    %v73 = vsel %vm71, %v72, %v70
    %v74 = vstv %s63
    %v75 = vmul.f32 %v73, %v74
    %v76 = vmul.f32 %v62, 6.2831855
    %v77 = vld [vmem:[#allocation4] sm:$0xff]
    %v78 = vand.u32 2147483647, %v76
    %vm79 = vcmp.le.f32.partialorder %v78, 0.7853982
    %vm80 = vcmp.lt.s32.totalorder %v76, 0
    %v81 = vand.u32 %v76, 2139095040
    %v82 = vshrl.u32 %v81, 23
    %v83 = vsub.s32 %v82, 127
    %v84 = vand.u32 2147483647, %v76
    %v85 = vand.u32 %v84, 8388607
    %v86 = vor.u32 %v85, 8388608
    %v87 = vsub.s32 0, %v86
    %v88 = vadd.s32 %v83, 1
    %vm89 = vcmp.gt.s32.totalorder %v88, 0
    %v90 = vsel %vm89, %v88, 0
    %v91 = vshrl.u32 %v90, 5
    %v92 = vand.u32 %v90, 31
    %v93 = vsub.s32 32, %v92
    %v94 = vshrl.u32 683565275, %v93
    %v95 = vshll.u32 683565275, %v92
    %v96 = vshrl.u32 2475754826, %v93
    %v97 = vor.u32 %v95, %v96
    %v98 = vshll.u32 2475754826, %v92
    %v99 = vshrl.u32 2131351028, %v93
    %v100 = vor.u32 %v98, %v99
    %v101 = vshll.u32 2131351028, %v92
    %v102 = vshrl.u32 2102212464, %v93
    %v103 = vor.u32 %v101, %v102
    %v104 = vshll.u32 2102212464, %v92
    %v105 = vshrl.u32 920167782, %v93
    %v106 = vor.u32 %v104, %v105
    %v107 = vshll.u32 920167782, %v92
    %v108 = vshrl.u32 1326507024, %v93
    %v109 = vor.u32 %v107, %v108
    %vm110 = vcmp.lt.s32.totalorder %v91, 1
    %vm111 = vcmp.lt.s32.totalorder %v91, 2
    %vm112 = vcmp.lt.s32.totalorder %v91, 3
    %vm113 = vcmp.lt.s32.totalorder %v91, 4
    %v114 = vsel %vm110, %v94, %v97
    %v115 = vsel %vm113, %v103, 2102212464
    %v116 = vsel %vm112, %v100, %v115
    %v117 = vsel %vm111, %v114, %v116
    %v118 = vsel %vm110, %v97, %v100
    %v119 = vsel %vm113, %v106, 920167782
    %v120 = vsel %vm112, %v103, %v119
    %v121 = vsel %vm111, %v118, %v120
    %v122 = vsel %vm110, %v100, %v103
    %v123 = vsel %vm113, %v109, 1326507024
    %v124 = vsel %vm112, %v106, %v123
    %v125 = vsel %vm111, %v122, %v124
    %v126 = vshll.u32 %v86, 8
    %v127 = vmul.u32.u64.compose %v126, %v125
    %v128 = vextract.low.u32 %v127
    %v129 = vextract.high.u32 %v127
    %v130 = vmul.u32.u64.compose %v126, %v121
    %v131 = vextract.low.u32 %v130
    %v132 = vextract.high.u32 %v130
    %v133 = vmul.u32 %v126, %v117
    %v134 = vadd.s32 %v129, %v131
    %vm135 = vc.u32 %v129, %v131
    %v136 = vadd.s32 %v132, 1
    %v137 = vsel %vm135, %v136, %v132
    %v138 = vadd.s32 %v133, %v137
    %v139 = vadd.s32 %v138, 536870912
    %v140 = vshrl.u32 %v139, 30
    %v141 = vshll.u32 %v140, 30
    %v142 = vsub.s32 %v138, %v141
    %vm143 = vcmp.lt.s32.totalorder %v142, 0
    %v144 = vsub.s32 0, %v142
    %v145 = vsel %vm143, %v144, %v142
    %v146 = vclz %v145
    %v147 = vsub.s32 %v146, 2
    %vm148 = vcmp.gt.s32.totalorder 0, %v147
    %v149 = vsel %vm148, 0, %v147
    %v150 = vsub.s32 32, %v149
    %v151 = vshll.u32 %v142, %v149
    %v152 = vshrl.u32 %v134, %v150
    %v153 = vor.u32 %v151, %v152
    %v154 = vsub.s32 4294967266, %v149
    %v155 = vadd.s32 %v154, 127
    %v156 = vshll.u32 %v155, 23
    %v157 = vor.u32 4788187, %v156
    %v158 = vand.u32 2147483647, %v157
    %v160 = vcvt.s32.f32 %v153
    %v161 = vmul.f32 %v160, %v158
    %v162 = vxor.u32 %v161, 2147483648
    %v163 = vsel %vm80, %v162, %v161
    %v164 = vsub.s32 4, %v140
    %v165 = vsel %vm80, %v164, %v140
    %v166 = vsel %vm79, %v76, %v163
    %v167 = vsel %vm79, 0, %v165
    %v168 = vcosq.f32.pop %v166
    %v169 = vsinq.f32.pop %v166
    %vm170 = vweird.f32 %v76
    %v171 = vand.u32 %v167, 3
    %vm172 = vcmp.lt.s32.totalorder %v171, 2
    %vm173 = vcmp.eq.s32.totalorder %v171, 0
    %v174 = vxor.u32 %v169, 2147483648
    %v175 = vsel %vm173, %v168, %v174
    %vm176 = vcmp.eq.s32.totalorder %v171, 2
    %v177 = vxor.u32 %v168, 2147483648
    %v178 = vsel %vm176, %v177, %v169
    %v179 = vsel %vm172, %v175, %v178
    %v180 = vsel %vm170, nan, %v179
    %v181 = vmul.f32 %v75, %v180
    %v182 = vadd.f32 %v77, %v181
    %183 = vst [vmem:[#allocation7] sm:$0xff] %v182
    %v184 = vld [vmem:[#allocation4 + $0x8] sm:$0xff]
    %v185 = vand.u32 2147483647, %v76
    %vm186 = vcmp.le.f32.partialorder %v185, 0.7853982
    %vm187 = vcmp.lt.s32.totalorder %v76, 0
    %v188 = vand.u32 %v76, 2139095040
    %v189 = vshrl.u32 %v188, 23
    %v190 = vsub.s32 %v189, 127
    %v191 = vand.u32 2147483647, %v76
    %v192 = vand.u32 %v191, 8388607
    %v193 = vor.u32 %v192, 8388608
    %v194 = vsub.s32 0, %v193
    %v195 = vadd.s32 %v190, 1
    %vm196 = vcmp.gt.s32.totalorder %v195, 0
    %v197 = vsel %vm196, %v195, 0
    %v198 = vshrl.u32 %v197, 5
    %v199 = vand.u32 %v197, 31
    %v200 = vsub.s32 32, %v199
    %v201 = vshrl.u32 683565275, %v200
    %v202 = vshll.u32 683565275, %v199
    %v203 = vshrl.u32 2475754826, %v200
    %v204 = vor.u32 %v202, %v203
    %v205 = vshll.u32 2475754826, %v199
    %v206 = vshrl.u32 2131351028, %v200
    %v207 = vor.u32 %v205, %v206
    %v208 = vshll.u32 2131351028, %v199
    %v209 = vshrl.u32 2102212464, %v200
    %v210 = vor.u32 %v208, %v209
    %v211 = vshll.u32 2102212464, %v199
    %v212 = vshrl.u32 920167782, %v200
    %v213 = vor.u32 %v211, %v212
    %v214 = vshll.u32 920167782, %v199
    %v215 = vshrl.u32 1326507024, %v200
    %v216 = vor.u32 %v214, %v215
    %vm217 = vcmp.lt.s32.totalorder %v198, 1
    %vm218 = vcmp.lt.s32.totalorder %v198, 2
    %vm219 = vcmp.lt.s32.totalorder %v198, 3
    %vm220 = vcmp.lt.s32.totalorder %v198, 4
    %v221 = vsel %vm217, %v201, %v204
    %v222 = vsel %vm220, %v210, 2102212464
    %v223 = vsel %vm219, %v207, %v222
    %v224 = vsel %vm218, %v221, %v223
    %v225 = vsel %vm217, %v204, %v207
    %v226 = vsel %vm220, %v213, 920167782
    %v227 = vsel %vm219, %v210, %v226
    %v228 = vsel %vm218, %v225, %v227
    %v229 = vsel %vm217, %v207, %v210
    %v230 = vsel %vm220, %v216, 1326507024
    %v231 = vsel %vm219, %v213, %v230
    %v232 = vsel %vm218, %v229, %v231
    %v233 = vshll.u32 %v193, 8
    %v234 = vmul.u32.u64.compose %v233, %v232
    %v235 = vextract.low.u32 %v234
    %v236 = vextract.high.u32 %v234
    %v237 = vmul.u32.u64.compose %v233, %v228
    %v238 = vextract.low.u32 %v237
    %v239 = vextract.high.u32 %v237
    %v240 = vmul.u32 %v233, %v224
    %v241 = vadd.s32 %v236, %v238
    %vm242 = vc.u32 %v236, %v238
    %v243 = vadd.s32 %v239, 1
    %v244 = vsel %vm242, %v243, %v239
    %v245 = vadd.s32 %v240, %v244
    %v246 = vadd.s32 %v245, 536870912
    %v247 = vshrl.u32 %v246, 30
    %v248 = vshll.u32 %v247, 30
    %v249 = vsub.s32 %v245, %v248
    %vm250 = vcmp.lt.s32.totalorder %v249, 0
    %v251 = vsub.s32 0, %v249
    %v252 = vsel %vm250, %v251, %v249
    %v253 = vclz %v252
    %v254 = vsub.s32 %v253, 2
    %vm255 = vcmp.gt.s32.totalorder 0, %v254
    %v256 = vsel %vm255, 0, %v254
    %v257 = vsub.s32 32, %v256
    %v258 = vshll.u32 %v249, %v256
    %v259 = vshrl.u32 %v241, %v257
    %v260 = vor.u32 %v258, %v259
    %v261 = vsub.s32 4294967266, %v256
    %v262 = vadd.s32 %v261, 127
    %v263 = vshll.u32 %v262, 23
    %v264 = vor.u32 4788187, %v263
    %v265 = vand.u32 2147483647, %v264
    %v267 = vcvt.s32.f32 %v260
    %v268 = vmul.f32 %v267, %v265
    %v269 = vxor.u32 %v268, 2147483648
    %v270 = vsel %vm187, %v269, %v268
    %v271 = vsub.s32 4, %v247
    %v272 = vsel %vm187, %v271, %v247
    %v273 = vsel %vm186, %v76, %v270
    %v274 = vsel %vm186, 0, %v272
    %v275 = vcosq.f32.pop %v273
    %v276 = vsinq.f32.pop %v273
    %vm277 = vweird.f32 %v76
    %v278 = vadd.s32 %v274, 3
    %v279 = vand.u32 %v278, 3
    %vm280 = vcmp.lt.s32.totalorder %v279, 2
    %vm281 = vcmp.eq.s32.totalorder %v279, 0
    %v282 = vxor.u32 %v276, 2147483648
    %v283 = vsel %vm281, %v275, %v282
    %vm284 = vcmp.eq.s32.totalorder %v279, 2
    %v285 = vxor.u32 %v275, 2147483648
    %v286 = vsel %vm284, %v285, %v276
    %v287 = vsel %vm280, %v283, %v286
    %v288 = vsel %vm277, nan, %v287
    %v289 = vmul.f32 %v75, %v288
    %v290 = vadd.f32 %v184, %v289
    %291 = vst [vmem:[#allocation7 + $0x8] sm:$0xff] %v290
    // Predicated region
    $region18: #{_noise_call.1} parent=1 // pred_check
      _
    $region19: #{_noise_call.1} parent=1 // pred_check_branch
      %293 = sbr.rel (0) target = $region21
    $region20: #{_noise_call.1} parent=1 // pred_region
      %s295 = ssub.s32 256, 256
      %296 = vsyncadd [#allocation6], %s295
      %s298 = sshll.u32 [#allocation7], 4
      %s299 = int_to_ptr.vmem [resolvable:$true] %s298
      %301 = dma.vmem_to_hbm [thread:$0]  %s299, 256, %s3, [#allocation6]
    $region21: #{_noise_call.1} parent=1 // pred_fallthru
      _
    // Predicated region
    $region22: #{_noise_call.1} parent=1 // pred_check
      _
    $region23: #{_noise_call.1} parent=1 // pred_check_branch
      %303 = sbr.rel (0) target = $region25
    $region24: #{_noise_call.1} parent=1 // pred_region
      %304 = dma.done [#allocation6], 256
    $region25: #{_noise_call.1} parent=1 // pred_fallthru
      _
    %305 = vsyncpa [#allocation5], 1
    %306 = vsyncpa [#allocation6], 1

</llo_original>
